<compile_context>
chip_gen: v7x
topology: tpu7x:2x2x1
jax: 0.10.0
libtpu: 0.0.40
codegen_flags: <defaults>
</compile_context>

<pallas_src>
import jax
import jax.numpy as jnp
from jax import lax
from jax.experimental import pallas as pl
from jax.experimental.pallas import tpu as pltpu

LANES = 128
MAX_TILE_ROWS = 8192      # (8192, 128) f32 = 4 MiB per stream per buffer.
CHUNK_ROWS = 256          # inner-loop chunk: keeps element-wise temporaries small.
FAST_PATH_ELEMS = 2048    # below this many f32 elements, plain jnp beats a kernel launch.
VMEM_LIMIT_BYTES = 32 * 1024 * 1024


def _make_kernel(tile_rows, total_rows, num_tiles, is_complex, needs_mask):
    num_full_chunks = tile_rows // CHUNK_ROWS
    rem_rows = tile_rows % CHUNK_ROWS   # multiple of 8 (tile_rows and CHUNK_ROWS are)

    def kernel(t_ref, h_ref, out_ref, acc_sq, acc_cr):
        i = pl.program_id(0)

        @pl.when(i == 0)
        def _init():
            acc_sq[...] = jnp.zeros_like(acc_sq)
            acc_cr[...] = jnp.zeros_like(acc_cr)

        tile_row0 = i * tile_rows

        def accum_block(r0, nrows, masked):
            # r0: row offset within this tile (static or dynamic); nrows: static.
            t = t_ref[pl.ds(r0, nrows), :]
            h = h_ref[pl.ds(r0, nrows), :]
            d = t - h
            if masked:
                rid = (lax.broadcasted_iota(jnp.int32, (nrows, LANES), 0)
                       + tile_row0 + r0)
                d = jnp.where(rid < total_rows, d, jnp.float32(0.0))
            # Pure-VALU add tree down to one vreg, then one accumulator RMW.
            acc_sq[...] += jnp.sum((d * d).reshape(-1, 8, LANES), axis=0)
            if is_complex:
                nbr = pltpu.roll(d, 1, axis=1)
                acc_cr[...] += jnp.sum((d * nbr).reshape(-1, 8, LANES), axis=0)

        def accum_tile(masked):
            if num_full_chunks > 0:
                def body(c, carry):
                    r0 = pl.multiple_of(c * CHUNK_ROWS, CHUNK_ROWS)
                    accum_block(r0, CHUNK_ROWS, masked)
                    return carry
                lax.fori_loop(0, num_full_chunks, body, 0)
            if rem_rows:
                accum_block(num_full_chunks * CHUNK_ROWS, rem_rows, masked)

        if needs_mask:
            @pl.when(i < num_tiles - 1)
            def _steady():
                accum_tile(False)

            @pl.when(i == num_tiles - 1)
            def _ragged():
                accum_tile(True)
        else:
            accum_tile(False)

        @pl.when(i == num_tiles - 1)
        def _finalize():
            if is_complex:
                lane = lax.broadcasted_iota(jnp.int32, (8, LANES), 1)
                sign = jnp.where((lane & 1) == 0, jnp.float32(1.0), jnp.float32(-1.0))
                # Re part: even lanes hold dr^2 sums, odd lanes di^2 sums.
                sum_re = jnp.sum(acc_sq[...] * sign)
                # Cross term: keep exactly the lanes whose roll-source is the re/im
                # partner lane (lane +/- 1).  Uses the same pltpu.roll (same shift) as
                # the hot loop, so this is correct for either roll convention.
                lane_f = lane.astype(jnp.float32)
                src = pltpu.roll(lane_f, 1, axis=1)
                keep = src == (lane_f + sign)
                sum_cr = jnp.sum(jnp.where(keep, acc_cr[...], jnp.float32(0.0)))
            else:
                sum_re = jnp.sum(acc_sq[...])
                sum_cr = jnp.float32(0.0)
            out_ref[0, 0] = sum_re
            out_ref[0, 1] = sum_cr

    return kernel


def _interleaved_f32(x):
    """Flatten to a float32 stream; complex64 becomes interleaved [re, im, re, im, ...]."""
    if jnp.issubdtype(x.dtype, jnp.complexfloating):
        x = x.astype(jnp.complex64)
        try:
            f = lax.bitcast_convert_type(x, jnp.float32)      # trailing (re, im) dim of 2
        except Exception:
            f = jnp.stack([jnp.real(x), jnp.imag(x)], axis=-1)
        return f.reshape(-1)
    return x.astype(jnp.float32).reshape(-1)


def _partial_sums_jnp(t, h, is_complex):
    """Plain-jnp partial sums on a flat interleaved f32 stream (tails / tiny inputs)."""
    d = t - h
    if is_complex:
        dr, di = d[0::2], d[1::2]
        return jnp.sum(dr * dr - di * di), jnp.sum(dr * di)
    return jnp.sum(d * d), jnp.float32(0.0)


def _combine(sum_re, sum_cross, n, is_complex):
    inv_n = jnp.float32(1.0 / n)
    mean_re = sum_re * inv_n
    if is_complex:
        mean_im = 2.0 * sum_cross * inv_n       # factor 2 folded in here
        return jnp.sqrt(mean_re * mean_re + mean_im * mean_im)
    return jnp.abs(mean_re)


def complex_mse_loss(s_target, s_hat):
    """Pallas implementation of ComplexMSELoss.forward: |mean((s_target - s_hat)**2)|."""
    assert s_target.shape == s_hat.shape
    n = s_target.size
    is_complex = (jnp.issubdtype(s_target.dtype, jnp.complexfloating)
                  or jnp.issubdtype(s_hat.dtype, jnp.complexfloating))
    if is_complex:
        s_target = s_target.astype(jnp.complex64)
        s_hat = s_hat.astype(jnp.complex64)

    t = _interleaved_f32(s_target)
    h = _interleaved_f32(s_hat)
    flat_len = t.shape[0]

    main_len = (flat_len // LANES) * LANES
    rows = main_len // LANES

    # Tiny-input fast path: launch + grid overhead would dominate the actual work.
    if flat_len < FAST_PATH_ELEMS or rows == 0:
        sum_re, sum_cr = _partial_sums_jnp(t, h, is_complex)
        return _combine(sum_re, sum_cr, n, is_complex)

    # The < 128-element tail is folded in with plain jnp (no whole-array pad copy).
    if main_len != flat_len:
        tail_re, tail_cr = _partial_sums_jnp(t[main_len:], h[main_len:], is_complex)
    else:
        tail_re = jnp.float32(0.0)
        tail_cr = jnp.float32(0.0)

    t_main = t[:main_len].reshape(rows, LANES)
    h_main = h[:main_len].reshape(rows, LANES)

    if rows >= MAX_TILE_ROWS:
        tile_rows = MAX_TILE_ROWS                 # multiple of CHUNK_ROWS
    else:
        tile_rows = ((rows + 7) // 8) * 8         # single (possibly overhanging) tile
    num_tiles = -(-rows // tile_rows)
    needs_mask = (rows % tile_rows) != 0

    kernel = _make_kernel(tile_rows, rows, num_tiles, is_complex, needs_mask)

    tile_spec = pl.BlockSpec((tile_rows, LANES), lambda i: (i, 0))
    out_spec = pl.BlockSpec((1, 2), lambda i: (0, 0), memory_space=pltpu.SMEM)

    partial = pl.pallas_call(
        kernel,
        out_shape=jax.ShapeDtypeStruct((1, 2), jnp.float32),
        grid_spec=pltpu.PrefetchScalarGridSpec(
            num_scalar_prefetch=0,
            grid=(num_tiles,),
            in_specs=[tile_spec, tile_spec],
            out_specs=out_spec,
            scratch_shapes=[
                pltpu.VMEM((8, LANES), jnp.float32),   # acc_sq (per-lane d*d sums)
                pltpu.VMEM((8, LANES), jnp.float32),   # acc_cr (per-lane d*roll(d) sums)
            ],
        ),
        compiler_params=pltpu.CompilerParams(
            dimension_semantics=("arbitrary",),
            vmem_limit_bytes=VMEM_LIMIT_BYTES,
        ),
        cost_estimate=pl.CostEstimate(
            flops=6 * main_len, transcendentals=0, bytes_accessed=2 * main_len * 4),
    )(t_main, h_main)

    sum_re = partial[0, 0] + tail_re
    sum_cr = partial[0, 1] + tail_cr
    return _combine(sum_re, sum_cr, n, is_complex)


if __name__ == "__main__":
    key = jax.random.PRNGKey(0)
    k1, k2, k3, k4 = jax.random.split(key, 4)

    # 1) Complex spectrogram-like inputs: batch=2, channels=4, 64x64 bins (kernel path).
    shape = (2, 4, 64, 64)
    s_target = (jax.random.normal(k1, shape, jnp.float32)
                + 1j * jax.random.normal(k2, shape, jnp.float32))
    s_hat = (jax.random.normal(k3, shape, jnp.float32)
             + 1j * jax.random.normal(k4, shape, jnp.float32))
    loss = jax.block_until_ready(complex_mse_loss(s_target, s_hat))
    ref = jnp.abs(jnp.mean((s_target - s_hat) ** 2))
    assert jnp.allclose(loss, ref, rtol=1e-3, atol=1e-6), (loss, ref)

    # 2) Ragged complex input: exercises the last-tile row mask + the jnp tail path.
    shape2 = (2, 3, 50, 33)
    t2 = (jax.random.normal(k1, shape2, jnp.float32)
          + 1j * jax.random.normal(k2, shape2, jnp.float32))
    h2 = (jax.random.normal(k3, shape2, jnp.float32)
          + 1j * jax.random.normal(k4, shape2, jnp.float32))
    loss2 = jax.block_until_ready(complex_mse_loss(t2, h2))
    ref2 = jnp.abs(jnp.mean((t2 - h2) ** 2))
    assert jnp.allclose(loss2, ref2, rtol=1e-3, atol=1e-6), (loss2, ref2)

    # 3) Real-valued inputs (kernel path without the cross term).
    shape3 = (8, 300)
    t3 = jax.random.normal(k1, shape3, jnp.float32)
    h3 = jax.random.normal(k3, shape3, jnp.float32)
    loss3 = jax.block_until_ready(complex_mse_loss(t3, h3))
    ref3 = jnp.abs(jnp.mean((t3 - h3) ** 2))
    assert jnp.allclose(loss3, ref3, rtol=1e-3, atol=1e-6), (loss3, ref3)

    # 4) Tiny input: pure-jnp fast path.
    shape4 = (4, 125)
    t4 = (jax.random.normal(k1, shape4, jnp.float32)
          + 1j * jax.random.normal(k2, shape4, jnp.float32))
    h4 = (jax.random.normal(k3, shape4, jnp.float32)
          + 1j * jax.random.normal(k4, shape4, jnp.float32))
    loss4 = jax.block_until_ready(complex_mse_loss(t4, h4))
    ref4 = jnp.abs(jnp.mean((t4 - h4) ** 2))
    assert jnp.allclose(loss4, ref4, rtol=1e-3, atol=1e-6), (loss4, ref4)

    print("KERNEL_OK")
</pallas_src>

<mosaic_0001>
module attributes {stable_mosaic.version = 11 : i64} {
  func.func @kernel(%arg0: i32, %arg1: memref<512x128xf32, #tpu.memory_space<vmem>>, %arg2: memref<512x128xf32, #tpu.memory_space<vmem>>, %arg3: memref<1x2xf32, #tpu.memory_space<smem>>, %arg4: memref<8x128xf32, #tpu.memory_space<vmem>>, %arg5: memref<8x128xf32, #tpu.memory_space<vmem>>) attributes {dimension_semantics = [#tpu.dimension_semantics<arbitrary>], iteration_bounds = array<i64: 1>, scalar_prefetch = 0 : i64, scratch_operands = 2 : i64, tpu.core_type = #tpu.core_type<tc>, window_params = [{transform_indices = @transform_0, window_bounds = array<i64: 512, 128>}, {transform_indices = @transform_1, window_bounds = array<i64: 512, 128>}, {transform_indices = @transform_2, window_bounds = array<i64: 1, 2>}]} {
    %c0_i32 = arith.constant 0 : i32
    %0 = arith.cmpi eq, %arg0, %c0_i32 : i32
    %1 = arith.extui %0 : i1 to i32
    %c0_i32_0 = arith.constant 0 : i32
    %2 = arith.cmpi ne, %1, %c0_i32_0 : i32
    scf.if %2 {
      %cst = arith.constant 0.000000e+00 : f32
      %7 = vector.broadcast %cst : f32 to vector<8x128xf32>
      %c0 = arith.constant 0 : index
      %c0_5 = arith.constant 0 : index
      %8 = vector.load %arg4[%c0, %c0_5] : memref<8x128xf32, #tpu.memory_space<vmem>>, vector<8x128xf32>
      tpu.vector_store %arg4[%c0, %c0_5], %7 {strides = array<i32>} : memref<8x128xf32, #tpu.memory_space<vmem>>, vector<8x128xf32>,
      %cst_6 = arith.constant 0.000000e+00 : f32
      %9 = vector.broadcast %cst_6 : f32 to vector<8x128xf32>
      %c0_7 = arith.constant 0 : index
      %c0_8 = arith.constant 0 : index
      %10 = vector.load %arg5[%c0_7, %c0_8] : memref<8x128xf32, #tpu.memory_space<vmem>>, vector<8x128xf32>
      tpu.vector_store %arg5[%c0_7, %c0_8], %9 {strides = array<i32>} : memref<8x128xf32, #tpu.memory_space<vmem>>, vector<8x128xf32>,
    } else {
    }
    %c0_i32_1 = arith.constant 0 : i32
    %c2_i32 = arith.constant 2 : i32
    %3 = arith.addi %c0_i32_1, %c2_i32 : i32
    %c1_i32 = arith.constant 1 : i32
    scf.for %arg6 = %c0_i32_1 to %3 step %c1_i32  : i32 {
      %c256_i32 = arith.constant 256 : i32
      %7 = arith.muli %arg6, %c256_i32 : i32
      %8 = tpu.assume_multiple %7, 256 : i32
      %9 = arith.index_cast %8 : i32 to index
      %c0 = arith.constant 0 : index
      %10 = vector.load %arg1[%9, %c0] : memref<512x128xf32, #tpu.memory_space<vmem>>, vector<256x128xf32>
      %11 = arith.index_cast %8 : i32 to index
      %c0_5 = arith.constant 0 : index
      %12 = vector.load %arg2[%11, %c0_5] : memref<512x128xf32, #tpu.memory_space<vmem>>, vector<256x128xf32>
      %13 = arith.subf %10, %12 : vector<256x128xf32>
      %c0_6 = arith.constant 0 : index
      %c0_7 = arith.constant 0 : index
      %14 = vector.load %arg4[%c0_6, %c0_7] : memref<8x128xf32, #tpu.memory_space<vmem>>, vector<8x128xf32>
      %15 = arith.mulf %13, %13 : vector<256x128xf32>
      %16 = vector.shape_cast %15 : vector<256x128xf32> to vector<32x8x128xf32>
      %cst = arith.constant dense<0.000000e+00> : vector<8x128xf32>
      %17 = vector.multi_reduction <add>, %16, %cst [0] : vector<32x8x128xf32> to vector<8x128xf32>
      %18 = arith.addf %14, %17 : vector<8x128xf32>
      %c0_8 = arith.constant 0 : index
      %c0_9 = arith.constant 0 : index
      %19 = vector.load %arg4[%c0_8, %c0_9] : memref<8x128xf32, #tpu.memory_space<vmem>>, vector<8x128xf32>
      tpu.vector_store %arg4[%c0_8, %c0_9], %18 {strides = array<i32>} : memref<8x128xf32, #tpu.memory_space<vmem>>, vector<8x128xf32>,
      %c1_i32_10 = arith.constant 1 : i32
      %20 = tpu.dynamic_rotate %13 by %c1_i32_10 dim 1 : vector<256x128xf32>, i32 -> vector<256x128xf32>
      %c0_11 = arith.constant 0 : index
      %c0_12 = arith.constant 0 : index
      %21 = vector.load %arg5[%c0_11, %c0_12] : memref<8x128xf32, #tpu.memory_space<vmem>>, vector<8x128xf32>
      %22 = arith.mulf %13, %20 : vector<256x128xf32>
      %23 = vector.shape_cast %22 : vector<256x128xf32> to vector<32x8x128xf32>
      %cst_13 = arith.constant dense<0.000000e+00> : vector<8x128xf32>
      %24 = vector.multi_reduction <add>, %23, %cst_13 [0] : vector<32x8x128xf32> to vector<8x128xf32>
      %25 = arith.addf %21, %24 : vector<8x128xf32>
      %c0_14 = arith.constant 0 : index
      %c0_15 = arith.constant 0 : index
      %26 = vector.load %arg5[%c0_14, %c0_15] : memref<8x128xf32, #tpu.memory_space<vmem>>, vector<8x128xf32>
      tpu.vector_store %arg5[%c0_14, %c0_15], %25 {strides = array<i32>} : memref<8x128xf32, #tpu.memory_space<vmem>>, vector<8x128xf32>,
    }
    %c2_i32_2 = arith.constant 2 : i32
    %c0_i32_3 = arith.constant 0 : i32
    %4 = arith.cmpi eq, %arg0, %c0_i32_3 : i32
    %5 = arith.extui %4 : i1 to i32
    %c0_i32_4 = arith.constant 0 : i32
    %6 = arith.cmpi ne, %5, %c0_i32_4 : i32
    scf.if %6 {
      %7 = tpu.iota {dimensions = array<i32: 1>} : vector<8x128xi32>
      %c1_i32_5 = arith.constant 1 : i32
      %8 = vector.broadcast %c1_i32_5 : i32 to vector<8x128xi32>
      %9 = arith.andi %7, %8 : vector<8x128xi32>
      %c0_i32_6 = arith.constant 0 : i32
      %10 = vector.broadcast %c0_i32_6 : i32 to vector<8x128xi32>
      %11 = arith.cmpi eq, %9, %10 : vector<8x128xi32>
      %cst = arith.constant 1.000000e+00 : f32
      %cst_7 = arith.constant -1.000000e+00 : f32
      %12 = vector.broadcast %cst : f32 to vector<8x128xf32>
      %13 = vector.broadcast %cst_7 : f32 to vector<8x128xf32>
      %14 = arith.select %11, %12, %13 : vector<8x128xi1>, vector<8x128xf32>
      %c0 = arith.constant 0 : index
      %c0_8 = arith.constant 0 : index
      %15 = vector.load %arg4[%c0, %c0_8] : memref<8x128xf32, #tpu.memory_space<vmem>>, vector<8x128xf32>
      %16 = arith.mulf %15, %14 : vector<8x128xf32>
      %17 = vector.shape_cast %16 : vector<8x128xf32> to vector<1x8x128xf32>
      %cst_9 = arith.constant dense<0.000000e+00> : vector<1xf32>
      %18 = vector.multi_reduction <add>, %17, %cst_9 [1, 2] : vector<1x8x128xf32> to vector<1xf32>
      %19 = vector.shape_cast %18 : vector<1xf32> to vector<1x1x1xf32>
      %20 = vector.extract %19[0, 0, 0] : f32 from vector<1x1x1xf32>
      %21 = arith.sitofp %7 : vector<8x128xi32> to vector<8x128xf32>
      %c1_i32_10 = arith.constant 1 : i32
      %22 = tpu.dynamic_rotate %21 by %c1_i32_10 dim 1 : vector<8x128xf32>, i32 -> vector<8x128xf32>
      %23 = arith.addf %21, %14 : vector<8x128xf32>
      %24 = arith.cmpf oeq, %22, %23 : vector<8x128xf32>
      %c0_11 = arith.constant 0 : index
      %c0_12 = arith.constant 0 : index
      %25 = vector.load %arg5[%c0_11, %c0_12] : memref<8x128xf32, #tpu.memory_space<vmem>>, vector<8x128xf32>
      %cst_13 = arith.constant 0.000000e+00 : f32
      %26 = vector.broadcast %cst_13 : f32 to vector<8x128xf32>
      %27 = arith.select %24, %25, %26 : vector<8x128xi1>, vector<8x128xf32>
      %28 = vector.shape_cast %27 : vector<8x128xf32> to vector<1x8x128xf32>
      %cst_14 = arith.constant dense<0.000000e+00> : vector<1xf32>
      %29 = vector.multi_reduction <add>, %28, %cst_14 [1, 2] : vector<1x8x128xf32> to vector<1xf32>
      %30 = vector.shape_cast %29 : vector<1xf32> to vector<1x1x1xf32>
      %31 = vector.extract %30[0, 0, 0] : f32 from vector<1x1x1xf32>
      %c0_15 = arith.constant 0 : index
      %c0_16 = arith.constant 0 : index
      %32 = memref.load %arg3[%c0_15, %c0_16] : memref<1x2xf32, #tpu.memory_space<smem>>
      memref.store %20, %arg3[%c0_15, %c0_16] : memref<1x2xf32, #tpu.memory_space<smem>>
      %c0_17 = arith.constant 0 : index
      %c1 = arith.constant 1 : index
      %33 = memref.load %arg3[%c0_17, %c1] : memref<1x2xf32, #tpu.memory_space<smem>>
      memref.store %31, %arg3[%c0_17, %c1] : memref<1x2xf32, #tpu.memory_space<smem>>
    } else {
    }
    return
  }
  func.func @transform_0(%arg0: i32) -> (i32, i32) {
    %c0_i32 = arith.constant 0 : i32
    %c0_i32_0 = arith.constant 0 : i32
    return %arg0, %c0_i32 : i32, i32
  }
  func.func @transform_1(%arg0: i32) -> (i32, i32) {
    %c0_i32 = arith.constant 0 : i32
    %c0_i32_0 = arith.constant 0 : i32
    return %arg0, %c0_i32 : i32, i32
  }
  func.func @transform_2(%arg0: i32) -> (i32, i32) {
    %c0_i32 = arith.constant 0 : i32
    %c0_i32_0 = arith.constant 0 : i32
    %c0_i32_1 = arith.constant 0 : i32
    return %c0_i32, %c0_i32_0 : i32, i32
  }
}

</mosaic_0001>

<llo_original>
// kernel: tpu_custom_call.1
$region0: #{tpu_custom_call.1}
  #allocation0 [shape = 'u32[]', space=smem, size = 0x4, offset = 0x4, fixed_abs, tag = 'smem constant byte address 0x4 - core index']
  #allocation1 [shape = 'u32[144,128]{1,0:T(1,128)}', space=vmem, size = 0x12000, scoped, tag = 'internal scratch']
  #allocation2 [shape = 'f32[8,128]{1,0:T(8,128)}', space=vmem, size = 0x1000, scoped, tag = 'scratch operand']
  #allocation3 [shape = 'f32[8,128]{1,0:T(8,128)}', space=vmem, size = 0x1000, scoped, tag = 'scratch operand']
  %s0 = inlined_call_operand.hbm [shape: f32[512,128], index: 0, kind: input, shape index: {}]
  %s1 = inlined_call_operand.hbm [shape: f32[512,128], index: 1, kind: input, shape index: {}]
  %s2 = inlined_call_operand.hbm [shape: f32[1,2], index: 2, kind: output, shape index: {}]
  %s3 = sld [smem:[#allocation0]]
  $region41: #{tpu_custom_call.1} parent=0
    _
  %s5 = ssub.s32 1, %s3
  %s6 = scalar_select 0, %s5, %s3
  $region1: #{tpu_custom_call.1} parent=0
    #allocation4 [shape = 'u8[262144]{0}', space=vmem, size = 0x40000, scoped, tag = 'input window, operand 0, single buffered']
    #allocation5 [shape = 's32[1]{0}', space=sflag, size = 0x4, scoped, tag = 'scoped memory for tpu_custom_call.1']
    #allocation6 [shape = 's32[1]{0}', space=sflag, size = 0x4, scoped, tag = 'scoped memory for tpu_custom_call.1']
    #allocation7 [shape = 'u8[262144]{0}', space=vmem, size = 0x40000, scoped, tag = 'input window, operand 1, single buffered']
    #allocation8 [shape = 's32[1]{0}', space=sflag, size = 0x4, scoped, tag = 'scoped memory for tpu_custom_call.1']
    #allocation9 [shape = 'u8[512]{0}', space=smem, size = 0x200, scoped, tag = 'output window, operand 0, single buffered']
    %7 = vsyncpa [#allocation5], 0
    %8 = vsyncpa [#allocation8], 0
    %9 = vsyncpa [#allocation6], 0
    // Predicated region
    $region2: #{tpu_custom_call.1} parent=1 // pred_check
      _
    $region3: #{tpu_custom_call.1} parent=1 // pred_check_branch
      %11 = sbr.rel (0) target = $region5
    $region4: #{tpu_custom_call.1} parent=1 // pred_region
      %s13 = ssub.s32 8192, 8192
      %14 = vsyncadd [#allocation5], %s13
      %s15 = sshll.u32 [#allocation4], 4
      %s16 = int_to_ptr.vmem [resolvable:$true] %s15
      %21 = dma.hbm_to_vmem [thread:$0]  %s0, 8192, %s16, [#allocation5], 128, 128, 8
    $region5: #{tpu_custom_call.1} parent=1 // pred_fallthru
      _
    // Predicated region
    $region6: #{tpu_custom_call.1} parent=1 // pred_check
      _
    $region7: #{tpu_custom_call.1} parent=1 // pred_check_branch
      %23 = sbr.rel (0) target = $region9
    $region8: #{tpu_custom_call.1} parent=1 // pred_region
      %s25 = ssub.s32 8192, 8192
      %26 = vsyncadd [#allocation8], %s25
      %s27 = sshll.u32 [#allocation7], 4
      %s28 = int_to_ptr.vmem [resolvable:$true] %s27
      %33 = dma.hbm_to_vmem [thread:$0]  %s1, 8192, %s28, [#allocation8], 128, 128, 8
    $region9: #{tpu_custom_call.1} parent=1 // pred_fallthru
      _
    // Predicated region
    $region10: #{tpu_custom_call.1} parent=1 // pred_check
      _
    $region11: #{tpu_custom_call.1} parent=1 // pred_check_branch
      %35 = sbr.rel (0) target = $region13
    $region12: #{tpu_custom_call.1} parent=1 // pred_region
      %36 = dma.done [#allocation5], 8192
    $region13: #{tpu_custom_call.1} parent=1 // pred_fallthru
      _
    // Predicated region
    $region14: #{tpu_custom_call.1} parent=1 // pred_check
      _
    $region15: #{tpu_custom_call.1} parent=1 // pred_check_branch
      %38 = sbr.rel (0) target = $region17
    $region16: #{tpu_custom_call.1} parent=1 // pred_region
      %39 = dma.done [#allocation8], 8192
    $region17: #{tpu_custom_call.1} parent=1 // pred_fallthru
      _
    %p40 = scmp.eq.s32.totalorder 0, 0
    // Predicated region
    $region18: #{tpu_custom_call.1} parent=1 // pred_check
      %p41 = pneg %p40
    $region19: #{tpu_custom_call.1} parent=1 // pred_check_branch
      %43 = sbr.rel (%p41) target = $region21
    $region20: #{tpu_custom_call.1} parent=1 // pred_region
      %44 = vst [vmem:[#allocation2] sm:$0xff] 0.0
      %45 = vst [vmem:[#allocation3] sm:$0xff] 0.0
    $region21: #{tpu_custom_call.1} parent=1 // pred_fallthru
      _
    loop: start=0, step=1, limit=2
    $region22: #{tpu_custom_call.1} parent=1 // loop_pre_header
      _
    $region23: #{tpu_custom_call.1} parent=1 // loop_header
      %s47 = sphi 0, %s51
      %p48 = scmp.ge.s32.totalorder %s47, 2
    $region24: #{tpu_custom_call.1} parent=1 // loop_header_branch
      %50 = sbr.rel (%p48) target = $region28
    $region25: #{tpu_custom_call.1} parent=1 // loop_body
      %s52 = smul.u32 %s47, 256
      %s53 = scalar_lea.vmem [#allocation4], %s52
      %v54 = vld [vmem:[%s53] sm:$0xff]
      %v55 = vld [vmem:[%s53 + $0x8] sm:$0xff]
      %v56 = vld [vmem:[%s53 + $0x10] sm:$0xff]
      %v57 = vld [vmem:[%s53 + $0x18] sm:$0xff]
      %v58 = vld [vmem:[%s53 + $0x20] sm:$0xff]
      %v59 = vld [vmem:[%s53 + $0x28] sm:$0xff]
      %v60 = vld [vmem:[%s53 + $0x30] sm:$0xff]
      %v61 = vld [vmem:[%s53 + $0x38] sm:$0xff]
      %v62 = vld [vmem:[%s53 + $0x40] sm:$0xff]
      %v63 = vld [vmem:[%s53 + $0x48] sm:$0xff]
      %v64 = vld [vmem:[%s53 + $0x50] sm:$0xff]
      %v65 = vld [vmem:[%s53 + $0x58] sm:$0xff]
      %v66 = vld [vmem:[%s53 + $0x60] sm:$0xff]
      %v67 = vld [vmem:[%s53 + $0x68] sm:$0xff]
      %v68 = vld [vmem:[%s53 + $0x70] sm:$0xff]
      %v69 = vld [vmem:[%s53 + $0x78] sm:$0xff]
      %v70 = vld [vmem:[%s53 + $0x80] sm:$0xff]
      %v71 = vld [vmem:[%s53 + $0x88] sm:$0xff]
      %v72 = vld [vmem:[%s53 + $0x90] sm:$0xff]
      %v73 = vld [vmem:[%s53 + $0x98] sm:$0xff]
      %v74 = vld [vmem:[%s53 + $0xa0] sm:$0xff]
      %v75 = vld [vmem:[%s53 + $0xa8] sm:$0xff]
      %v76 = vld [vmem:[%s53 + $0xb0] sm:$0xff]
      %v77 = vld [vmem:[%s53 + $0xb8] sm:$0xff]
      %v78 = vld [vmem:[%s53 + $0xc0] sm:$0xff]
      %v79 = vld [vmem:[%s53 + $0xc8] sm:$0xff]
      %v80 = vld [vmem:[%s53 + $0xd0] sm:$0xff]
      %v81 = vld [vmem:[%s53 + $0xd8] sm:$0xff]
      %v82 = vld [vmem:[%s53 + $0xe0] sm:$0xff]
      %v83 = vld [vmem:[%s53 + $0xe8] sm:$0xff]
      %v84 = vld [vmem:[%s53 + $0xf0] sm:$0xff]
      %v85 = vld [vmem:[%s53 + $0xf8] sm:$0xff]
      %s86 = scalar_lea.vmem [#allocation7], %s52
      %v87 = vld [vmem:[%s86] sm:$0xff]
      %v88 = vld [vmem:[%s86 + $0x8] sm:$0xff]
      %v89 = vld [vmem:[%s86 + $0x10] sm:$0xff]
      %v90 = vld [vmem:[%s86 + $0x18] sm:$0xff]
      %v91 = vld [vmem:[%s86 + $0x20] sm:$0xff]
      %v92 = vld [vmem:[%s86 + $0x28] sm:$0xff]
      %v93 = vld [vmem:[%s86 + $0x30] sm:$0xff]
      %v94 = vld [vmem:[%s86 + $0x38] sm:$0xff]
      %v95 = vld [vmem:[%s86 + $0x40] sm:$0xff]
      %v96 = vld [vmem:[%s86 + $0x48] sm:$0xff]
      %v97 = vld [vmem:[%s86 + $0x50] sm:$0xff]
      %v98 = vld [vmem:[%s86 + $0x58] sm:$0xff]
      %v99 = vld [vmem:[%s86 + $0x60] sm:$0xff]
      %v100 = vld [vmem:[%s86 + $0x68] sm:$0xff]
      %v101 = vld [vmem:[%s86 + $0x70] sm:$0xff]
      %v102 = vld [vmem:[%s86 + $0x78] sm:$0xff]
      %v103 = vld [vmem:[%s86 + $0x80] sm:$0xff]
      %v104 = vld [vmem:[%s86 + $0x88] sm:$0xff]
      %v105 = vld [vmem:[%s86 + $0x90] sm:$0xff]
      %v106 = vld [vmem:[%s86 + $0x98] sm:$0xff]
      %v107 = vld [vmem:[%s86 + $0xa0] sm:$0xff]
      %v108 = vld [vmem:[%s86 + $0xa8] sm:$0xff]
      %v109 = vld [vmem:[%s86 + $0xb0] sm:$0xff]
      %v110 = vld [vmem:[%s86 + $0xb8] sm:$0xff]
      %v111 = vld [vmem:[%s86 + $0xc0] sm:$0xff]
      %v112 = vld [vmem:[%s86 + $0xc8] sm:$0xff]
      %v113 = vld [vmem:[%s86 + $0xd0] sm:$0xff]
      %v114 = vld [vmem:[%s86 + $0xd8] sm:$0xff]
      %v115 = vld [vmem:[%s86 + $0xe0] sm:$0xff]
      %v116 = vld [vmem:[%s86 + $0xe8] sm:$0xff]
      %v117 = vld [vmem:[%s86 + $0xf0] sm:$0xff]
      %v118 = vld [vmem:[%s86 + $0xf8] sm:$0xff]
      %v119 = vsub.f32 %v54, %v87
      %v120 = vsub.f32 %v55, %v88
      %v121 = vsub.f32 %v56, %v89
      %v122 = vsub.f32 %v57, %v90
      %v123 = vsub.f32 %v58, %v91
      %v124 = vsub.f32 %v59, %v92
      %v125 = vsub.f32 %v60, %v93
      %v126 = vsub.f32 %v61, %v94
      %v127 = vsub.f32 %v62, %v95
      %v128 = vsub.f32 %v63, %v96
      %v129 = vsub.f32 %v64, %v97
      %v130 = vsub.f32 %v65, %v98
      %v131 = vsub.f32 %v66, %v99
      %v132 = vsub.f32 %v67, %v100
      %v133 = vsub.f32 %v68, %v101
      %v134 = vsub.f32 %v69, %v102
      %v135 = vsub.f32 %v70, %v103
      %v136 = vsub.f32 %v71, %v104
      %v137 = vsub.f32 %v72, %v105
      %v138 = vsub.f32 %v73, %v106
      %v139 = vsub.f32 %v74, %v107
      %v140 = vsub.f32 %v75, %v108
      %v141 = vsub.f32 %v76, %v109
      %v142 = vsub.f32 %v77, %v110
      %v143 = vsub.f32 %v78, %v111
      %v144 = vsub.f32 %v79, %v112
      %v145 = vsub.f32 %v80, %v113
      %v146 = vsub.f32 %v81, %v114
      %v147 = vsub.f32 %v82, %v115
      %v148 = vsub.f32 %v83, %v116
      %v149 = vsub.f32 %v84, %v117
      %v150 = vsub.f32 %v85, %v118
      %v151 = vld [vmem:[#allocation2] sm:$0xff]
      %v152 = vmul.f32 %v119, %v119
      %v153 = vmul.f32 %v120, %v120
      %v154 = vmul.f32 %v121, %v121
      %v155 = vmul.f32 %v122, %v122
      %v156 = vmul.f32 %v123, %v123
      %v157 = vmul.f32 %v124, %v124
      %v158 = vmul.f32 %v125, %v125
      %v159 = vmul.f32 %v126, %v126
      %v160 = vmul.f32 %v127, %v127
      %v161 = vmul.f32 %v128, %v128
      %v162 = vmul.f32 %v129, %v129
      %v163 = vmul.f32 %v130, %v130
      %v164 = vmul.f32 %v131, %v131
      %v165 = vmul.f32 %v132, %v132
      %v166 = vmul.f32 %v133, %v133
      %v167 = vmul.f32 %v134, %v134
      %v168 = vmul.f32 %v135, %v135
      %v169 = vmul.f32 %v136, %v136
      %v170 = vmul.f32 %v137, %v137
      %v171 = vmul.f32 %v138, %v138
      %v172 = vmul.f32 %v139, %v139
      %v173 = vmul.f32 %v140, %v140
      %v174 = vmul.f32 %v141, %v141
      %v175 = vmul.f32 %v142, %v142
      %v176 = vmul.f32 %v143, %v143
      %v177 = vmul.f32 %v144, %v144
      %v178 = vmul.f32 %v145, %v145
      %v179 = vmul.f32 %v146, %v146
      %v180 = vmul.f32 %v147, %v147
      %v181 = vmul.f32 %v148, %v148
      %v182 = vmul.f32 %v149, %v149
      %v183 = vmul.f32 %v150, %v150
      %v184 = vadd.f32 %v152, %v153
      %v185 = vadd.f32 %v184, %v154
      %v186 = vadd.f32 %v185, %v155
      %v187 = vadd.f32 %v186, %v156
      %v188 = vadd.f32 %v187, %v157
      %v189 = vadd.f32 %v188, %v158
      %v190 = vadd.f32 %v189, %v159
      %v191 = vadd.f32 %v190, %v160
      %v192 = vadd.f32 %v191, %v161
      %v193 = vadd.f32 %v192, %v162
      %v194 = vadd.f32 %v193, %v163
      %v195 = vadd.f32 %v194, %v164
      %v196 = vadd.f32 %v195, %v165
      %v197 = vadd.f32 %v196, %v166
      %v198 = vadd.f32 %v197, %v167
      %v199 = vadd.f32 %v198, %v168
      %v200 = vadd.f32 %v199, %v169
      %v201 = vadd.f32 %v200, %v170
      %v202 = vadd.f32 %v201, %v171
      %v203 = vadd.f32 %v202, %v172
      %v204 = vadd.f32 %v203, %v173
      %v205 = vadd.f32 %v204, %v174
      %v206 = vadd.f32 %v205, %v175
      %v207 = vadd.f32 %v206, %v176
      %v208 = vadd.f32 %v207, %v177
      %v209 = vadd.f32 %v208, %v178
      %v210 = vadd.f32 %v209, %v179
      %v211 = vadd.f32 %v210, %v180
      %v212 = vadd.f32 %v211, %v181
      %v213 = vadd.f32 %v212, %v182
      %v214 = vadd.f32 %v213, %v183
      %v215 = vadd.f32 %v151, %v214
      %216 = vst [vmem:[#allocation2] sm:$0xff] %v215
      %217 = vrot.lane.b32.xlu0 %v119, 1
      %v218 = vpop.permute.xlu0 %217
      %219 = vrot.lane.b32.xlu0 %v120, 1
      %v220 = vpop.permute.xlu0 %219
      %221 = vrot.lane.b32.xlu0 %v121, 1
      %v222 = vpop.permute.xlu0 %221
      %223 = vrot.lane.b32.xlu0 %v122, 1
      %v224 = vpop.permute.xlu0 %223
      %225 = vrot.lane.b32.xlu0 %v123, 1
      %v226 = vpop.permute.xlu0 %225
      %227 = vrot.lane.b32.xlu0 %v124, 1
      %v228 = vpop.permute.xlu0 %227
      %229 = vrot.lane.b32.xlu0 %v125, 1
      %v230 = vpop.permute.xlu0 %229
      %231 = vrot.lane.b32.xlu0 %v126, 1
      %v232 = vpop.permute.xlu0 %231
      %233 = vrot.lane.b32.xlu0 %v127, 1
      %v234 = vpop.permute.xlu0 %233
      %235 = vrot.lane.b32.xlu0 %v128, 1
      %v236 = vpop.permute.xlu0 %235
      %237 = vrot.lane.b32.xlu0 %v129, 1
      %v238 = vpop.permute.xlu0 %237
      %239 = vrot.lane.b32.xlu0 %v130, 1
      %v240 = vpop.permute.xlu0 %239
      %241 = vrot.lane.b32.xlu0 %v131, 1
      %v242 = vpop.permute.xlu0 %241
      %243 = vrot.lane.b32.xlu0 %v132, 1
      %v244 = vpop.permute.xlu0 %243
      %245 = vrot.lane.b32.xlu0 %v133, 1
      %v246 = vpop.permute.xlu0 %245
      %247 = vrot.lane.b32.xlu0 %v134, 1
      %v248 = vpop.permute.xlu0 %247
      %249 = vrot.lane.b32.xlu0 %v135, 1
      %v250 = vpop.permute.xlu0 %249
      %251 = vrot.lane.b32.xlu0 %v136, 1
      %v252 = vpop.permute.xlu0 %251
      %253 = vrot.lane.b32.xlu0 %v137, 1
      %v254 = vpop.permute.xlu0 %253
      %255 = vrot.lane.b32.xlu0 %v138, 1
      %v256 = vpop.permute.xlu0 %255
      %257 = vrot.lane.b32.xlu0 %v139, 1
      %v258 = vpop.permute.xlu0 %257
      %259 = vrot.lane.b32.xlu0 %v140, 1
      %v260 = vpop.permute.xlu0 %259
      %261 = vrot.lane.b32.xlu0 %v141, 1
      %v262 = vpop.permute.xlu0 %261
      %263 = vrot.lane.b32.xlu0 %v142, 1
      %v264 = vpop.permute.xlu0 %263
      %265 = vrot.lane.b32.xlu0 %v143, 1
      %v266 = vpop.permute.xlu0 %265
      %267 = vrot.lane.b32.xlu0 %v144, 1
      %v268 = vpop.permute.xlu0 %267
      %269 = vrot.lane.b32.xlu0 %v145, 1
      %v270 = vpop.permute.xlu0 %269
      %271 = vrot.lane.b32.xlu0 %v146, 1
      %v272 = vpop.permute.xlu0 %271
      %273 = vrot.lane.b32.xlu0 %v147, 1
      %v274 = vpop.permute.xlu0 %273
      %275 = vrot.lane.b32.xlu0 %v148, 1
      %v276 = vpop.permute.xlu0 %275
      %277 = vrot.lane.b32.xlu0 %v149, 1
      %v278 = vpop.permute.xlu0 %277
      %279 = vrot.lane.b32.xlu0 %v150, 1
      %v280 = vpop.permute.xlu0 %279
      %v281 = vld [vmem:[#allocation3] sm:$0xff]
      %v282 = vmul.f32 %v119, %v218
      %v283 = vmul.f32 %v120, %v220
      %v284 = vmul.f32 %v121, %v222
      %v285 = vmul.f32 %v122, %v224
      %v286 = vmul.f32 %v123, %v226
      %v287 = vmul.f32 %v124, %v228
      %v288 = vmul.f32 %v125, %v230
      %v289 = vmul.f32 %v126, %v232
      %v290 = vmul.f32 %v127, %v234
      %v291 = vmul.f32 %v128, %v236
      %v292 = vmul.f32 %v129, %v238
      %v293 = vmul.f32 %v130, %v240
      %v294 = vmul.f32 %v131, %v242
      %v295 = vmul.f32 %v132, %v244
      %v296 = vmul.f32 %v133, %v246
      %v297 = vmul.f32 %v134, %v248
      %v298 = vmul.f32 %v135, %v250
      %v299 = vmul.f32 %v136, %v252
      %v300 = vmul.f32 %v137, %v254
      %v301 = vmul.f32 %v138, %v256
      %v302 = vmul.f32 %v139, %v258
      %v303 = vmul.f32 %v140, %v260
      %v304 = vmul.f32 %v141, %v262
      %v305 = vmul.f32 %v142, %v264
      %v306 = vmul.f32 %v143, %v266
      %v307 = vmul.f32 %v144, %v268
      %v308 = vmul.f32 %v145, %v270
      %v309 = vmul.f32 %v146, %v272
      %v310 = vmul.f32 %v147, %v274
      %v311 = vmul.f32 %v148, %v276
      %v312 = vmul.f32 %v149, %v278
      %v313 = vmul.f32 %v150, %v280
      %v314 = vadd.f32 %v282, %v283
      %v315 = vadd.f32 %v314, %v284
      %v316 = vadd.f32 %v315, %v285
      %v317 = vadd.f32 %v316, %v286
      %v318 = vadd.f32 %v317, %v287
      %v319 = vadd.f32 %v318, %v288
      %v320 = vadd.f32 %v319, %v289
      %v321 = vadd.f32 %v320, %v290
      %v322 = vadd.f32 %v321, %v291
      %v323 = vadd.f32 %v322, %v292
      %v324 = vadd.f32 %v323, %v293
      %v325 = vadd.f32 %v324, %v294
      %v326 = vadd.f32 %v325, %v295
      %v327 = vadd.f32 %v326, %v296
      %v328 = vadd.f32 %v327, %v297
      %v329 = vadd.f32 %v328, %v298
      %v330 = vadd.f32 %v329, %v299
      %v331 = vadd.f32 %v330, %v300
      %v332 = vadd.f32 %v331, %v301
      %v333 = vadd.f32 %v332, %v302
      %v334 = vadd.f32 %v333, %v303
      %v335 = vadd.f32 %v334, %v304
      %v336 = vadd.f32 %v335, %v305
      %v337 = vadd.f32 %v336, %v306
      %v338 = vadd.f32 %v337, %v307
      %v339 = vadd.f32 %v338, %v308
      %v340 = vadd.f32 %v339, %v309
      %v341 = vadd.f32 %v340, %v310
      %v342 = vadd.f32 %v341, %v311
      %v343 = vadd.f32 %v342, %v312
      %v344 = vadd.f32 %v343, %v313
      %v345 = vadd.f32 %v281, %v344
      %346 = vst [vmem:[#allocation3] sm:$0xff] %v345
    $region26: #{tpu_custom_call.1} parent=1 // loop_footer
      %s51 = sadd.s32 1, %s47
    $region27: #{tpu_custom_call.1} parent=1 // loop_footer_branch
      %46 = sbr.rel target = $region23
    $region28: #{tpu_custom_call.1} parent=1 // loop_exit
      _
    // Predicated region
    $region29: #{tpu_custom_call.1} parent=1 // pred_check
      %p347 = pneg %p40
    $region30: #{tpu_custom_call.1} parent=1 // pred_check_branch
      %349 = sbr.rel (%p347) target = $region32
    $region31: #{tpu_custom_call.1} parent=1 // pred_region
      %v350 = vlaneseq
      %v351 = vand.u32 %v350, 127
      %v352 = vand.u32 %v351, 1
      %vm353 = vcmp.eq.s32.totalorder %v352, 0
      %v354 = vsel %vm353, 1.0, -1.0
      %v355 = vld [vmem:[#allocation2] sm:$0xff]
      %v356 = vmul.f32 %v355, %v354
      %357 = vadd.xlane.f32.xlu0 %v356
      %v358 = vpop.xlane.xlu0 %357
      %v359 = vrot.slane %v358, 4
      %v360 = vadd.f32 %v358, %v359
      %v361 = vrot.slane %v360, 2
      %v362 = vadd.f32 %v360, %v361
      %v363 = vrot.slane %v362, 1
      %v364 = vadd.f32 %v362, %v363
      %s365 = vtos %v364
      %v366 = vcvt.s32.f32 %v351
      %367 = vrot.lane.b32.xlu0 %v366, 1
      %v368 = vpop.permute.xlu0 %367
      %v369 = vadd.f32 %v366, %v354
      %vm370 = vcmp.eq.f32.partialorder %v368, %v369
      %v371 = vld [vmem:[#allocation3] sm:$0xff]
      %v372 = vsel %vm370, %v371, 0.0
      %373 = vadd.xlane.f32.xlu0 %v372
      %v374 = vpop.xlane.xlu0 %373
      %v375 = vrot.slane %v374, 4
      %v376 = vadd.f32 %v374, %v375
      %v377 = vrot.slane %v376, 2
      %v378 = vadd.f32 %v376, %v377
      %v379 = vrot.slane %v378, 1
      %v380 = vadd.f32 %v378, %v379
      %s381 = vtos %v380
      %s382 = scalar_lea.smem [#allocation9], 0
      %383 = sst [smem:[%s382]] %s365
      %s384 = scalar_lea.smem [#allocation9], 1
      %385 = sst [smem:[%s384]] %s381
    $region32: #{tpu_custom_call.1} parent=1 // pred_fallthru
      _
    // Predicated region
    $region33: #{tpu_custom_call.1} parent=1 // pred_check
      _
    $region34: #{tpu_custom_call.1} parent=1 // pred_check_branch
      %387 = sbr.rel (0) target = $region36
    $region35: #{tpu_custom_call.1} parent=1 // pred_region
      %s389 = ssub.s32 16, 16
      %390 = vsyncadd [#allocation6], %s389
      %393 = dma.smem_to_hbm [#allocation9], 16, %s2, [#allocation6]
    $region36: #{tpu_custom_call.1} parent=1 // pred_fallthru
      _
    // Predicated region
    $region37: #{tpu_custom_call.1} parent=1 // pred_check
      _
    $region38: #{tpu_custom_call.1} parent=1 // pred_check_branch
      %395 = sbr.rel (0) target = $region40
    $region39: #{tpu_custom_call.1} parent=1 // pred_region
      %396 = dma.done [#allocation6], 16
    $region40: #{tpu_custom_call.1} parent=1 // pred_fallthru
      _
    %397 = sfence
    %398 = vsyncpa [#allocation5], 1
    %399 = vsyncpa [#allocation8], 1
    %400 = vsyncpa [#allocation6], 1

</llo_original>
